<compile_context>
chip_gen: v5e
topology: v5e:2x2
jax: 0.10.0
libtpu: 0.0.40
codegen_flags: <defaults>
</compile_context>

<pallas_src>
import math

import jax
import jax.numpy as jnp
from jax.experimental import pallas as pl
from jax.experimental.pallas import tpu as pltpu


# ----------------------------- in-kernel helpers -----------------------------

def _pow_pos(x, p):
    """x ** p for x >= 0 (x == 0 handled via log->-inf), static python float p."""
    return jnp.exp(jnp.float32(p) * jnp.log(x))


def _exp_t_k(u, t):
    """Tempered exp for static t != 1 (kernel version)."""
    base = jnp.maximum(1.0 + (1.0 - t) * u, 0.0)
    return _pow_pos(base, 1.0 / (1.0 - t))


def _log_t_py(u, t):
    if t == 1.0:
        return math.log(u)
    return (u ** (1.0 - t) - 1.0) / (1.0 - t)


# --------------------------------- kernel ------------------------------------

def _make_kernel(t1, t2, num_iters, n_valid, tm, num_classes, on_val, off_val,
                 lab_const):
    C = num_classes

    def kernel(act_ref, lab_ref, out_ref):
        x = act_ref[...].astype(jnp.float32)                  # (TM, C) logits
        lab = lab_ref[...]                                    # (TM, 1) int32

        # smoothed one-hot labels, built in-kernel (lane iota compare)
        class_iota = jax.lax.broadcasted_iota(jnp.int32, (tm, C), 1)
        lo = jnp.where(class_iota == lab, jnp.float32(on_val),
                       jnp.float32(off_val))                  # (TM, C)

        # ---------------- tempered softmax with temperature t2 ----------------
        mu = jnp.max(x, axis=-1, keepdims=True)               # (TM, 1)
        a0 = x - mu
        if t2 == 1.0:
            e = jnp.exp(a0)
            z = jnp.sum(e, axis=-1, keepdims=True)
            prob = e / z
        elif t2 > 1.0:
            # fixed-point iteration
            an = a0
            for _ in range(num_iters):
                z = jnp.sum(_exp_t_k(an, t2), axis=-1, keepdims=True)
                an = a0 * _pow_pos(z, 1.0 - t2)
            z = jnp.sum(_exp_t_k(an, t2), axis=-1, keepdims=True)
            # norm = -log_t(1/z, t2) + mu = (z^(t2-1) - 1)/(t2-1) + mu
            norm = (_pow_pos(z, t2 - 1.0) - 1.0) / (t2 - 1.0) + mu
            prob = _exp_t_k(x - norm, t2)
        else:
            # binary search (t2 < 1, finite support)
            inv = 1.0 / (1.0 - t2)
            eff_dim = jnp.sum(jnp.where(a0 > -inv, 1.0, 0.0),
                              axis=-1, keepdims=True)
            lower = jnp.zeros_like(eff_dim)
            upper = (_pow_pos(eff_dim, t2 - 1.0) - 1.0) / (t2 - 1.0)
            for _ in range(num_iters):
                lp = 0.5 * (upper + lower)
                sp = jnp.sum(_exp_t_k(a0 - lp, t2), axis=-1, keepdims=True)
                upd = jnp.where(sp < 1.0, 1.0, 0.0)
                lower = lower * upd + (1.0 - upd) * lp
                upper = upper * (1.0 - upd) + upd * lp
            lp = 0.5 * (upper + lower)
            prob = _exp_t_k(a0 - lp, t2)

        # -------------------------- loss terms --------------------------------
        # share one log(prob) between prob^(1-t1) and prob^(2-t1)
        if t1 == 1.0:
            logt_prob = jnp.log(prob)
            pow2 = prob                                        # prob^(2-t1)
        else:
            logp = jnp.log(prob)
            q = jnp.exp(jnp.float32(1.0 - t1) * logp)          # prob^(1-t1)
            logt_prob = (q - 1.0) / (1.0 - t1)
            pow2 = q * prob                                    # prob^(2-t1)

        row_loss = (jnp.float32(lab_const)
                    - jnp.sum(lo * logt_prob, axis=-1, keepdims=True)
                    + jnp.sum(pow2, axis=-1, keepdims=True)
                    * jnp.float32(1.0 / (2.0 - t1)))           # (TM, 1)

        # mask padded rows with the true row count
        row_idx = (pl.program_id(0) * tm
                   + jax.lax.broadcasted_iota(jnp.int32, (tm, 1), 0))
        row_loss = jnp.where(row_idx < n_valid, row_loss, 0.0)
        out_ref[...] = row_loss

    return kernel


# --------------------------------- wrapper -----------------------------------

def bi_tempered_logistic_loss_tpu(activations, labels, t1, t2,
                                  label_smoothing=0.0, num_iters=5,
                                  reduction='mean'):
    activations = jnp.asarray(activations)
    labels = jnp.asarray(labels)
    orig_shape = activations.shape
    C = int(orig_shape[-1])
    N = 1
    for d in orig_shape[:-1]:
        N *= int(d)
    acts2 = activations.reshape(N, C)

    if labels.ndim == activations.ndim:
        # one-hot labels -> class indices
        # TODO(synk): soft (non one-hot) label distributions are reduced to argmax here.
        lab_idx = jnp.argmax(labels.reshape(N, C), axis=-1).astype(jnp.int32)
    else:
        lab_idx = labels.reshape(N).astype(jnp.int32)

    # row-tile sizing: keep one f32 activation block <= 2 MiB (double-buffered
    # => <= 4 MiB, safe under default scoped VMEM on v5e/v6e/v7x)
    tm = 512
    while tm > 8 and tm * C * 4 > (2 << 20):
        tm //= 2
    TM = min(tm, ((N + 7) // 8) * 8)
    N_pad = ((N + TM - 1) // TM) * TM
    if N_pad != N:
        acts2 = jnp.pad(acts2, ((0, N_pad - N), (0, 0)))
        lab_idx = jnp.pad(lab_idx, (0, N_pad - N))
    lab2 = lab_idx.reshape(N_pad, 1)
    grid = (N_pad // TM,)

    # label-smoothing values and the label-only loss terms (compile-time)
    on_val = 1.0 - label_smoothing
    off_val = (label_smoothing / (C - 1)) if C > 1 else 0.0

    def _lab_term(v):
        return v * _log_t_py(v + 1e-10, t1) - (v ** (2.0 - t1)) / (2.0 - t1)

    lab_const = _lab_term(on_val) + (C - 1) * _lab_term(off_val)

    kernel = _make_kernel(float(t1), float(t2), int(num_iters), N, TM, C,
                          on_val, off_val, lab_const)

    out = pl.pallas_call(
        kernel,
        out_shape=jax.ShapeDtypeStruct((N_pad, 1), jnp.float32),
        grid_spec=pltpu.PrefetchScalarGridSpec(
            num_scalar_prefetch=0,
            grid=grid,
            in_specs=[
                pl.BlockSpec((TM, C), lambda i: (i, 0)),
                pl.BlockSpec((TM, 1), lambda i: (i, 0)),
            ],
            out_specs=pl.BlockSpec((TM, 1), lambda i: (i, 0)),
        ),
        compiler_params=pltpu.CompilerParams(
            dimension_semantics=("parallel",),
        ),
    )(acts2, lab2)

    per_row = out[:N, 0]
    if reduction == 'none':
        return per_row.reshape(orig_shape[:-1])
    if reduction == 'sum':
        return jnp.sum(per_row)
    return jnp.sum(per_row) / jnp.float32(N)


class BiTemperedLogisticLoss:
    """Forward-only parity wrapper matching the PyTorch module."""

    def __init__(self, t1, t2, label_smooth):
        self.t1 = t1
        self.t2 = t2
        self.label_smooth = label_smooth

    def __call__(self, logits, labels):
        return bi_tempered_logistic_loss_tpu(
            logits, labels, self.t1, self.t2, self.label_smooth)


# ------------------------------ pure-JAX reference ----------------------------

def _exp_t_ref(u, t):
    if t == 1.0:
        return jnp.exp(u)
    return jnp.maximum(1.0 + (1.0 - t) * u, 0.0) ** (1.0 / (1.0 - t))


def _log_t_ref(u, t):
    if t == 1.0:
        return jnp.log(u)
    return (u ** (1.0 - t) - 1.0) / (1.0 - t)


def _ref_loss(activations, labels_int, t1, t2, label_smoothing=0.0, num_iters=5):
    C = activations.shape[-1]
    onehot = jax.nn.one_hot(labels_int, C, dtype=activations.dtype)
    if label_smoothing > 0:
        onehot = ((1 - label_smoothing * C / (C - 1)) * onehot
                  + label_smoothing / (C - 1))
    if t2 == 1.0:
        prob = jax.nn.softmax(activations, axis=-1)
    elif t2 > 1.0:
        mu = jnp.max(activations, -1, keepdims=True)
        a0 = activations - mu
        an = a0
        for _ in range(num_iters):
            z = jnp.sum(_exp_t_ref(an, t2), -1, keepdims=True)
            an = a0 * z ** (1.0 - t2)
        z = jnp.sum(_exp_t_ref(an, t2), -1, keepdims=True)
        norm = -_log_t_ref(1.0 / z, t2) + mu
        prob = _exp_t_ref(activations - norm, t2)
    else:
        mu = jnp.max(activations, -1, keepdims=True)
        a0 = activations - mu
        eff = jnp.sum((a0 > -1.0 / (1.0 - t2)).astype(activations.dtype),
                      -1, keepdims=True)
        lower = jnp.zeros_like(eff)
        upper = -_log_t_ref(1.0 / eff, t2) * jnp.ones_like(lower)
        for _ in range(num_iters):
            lp = (upper + lower) / 2.0
            sp = jnp.sum(_exp_t_ref(a0 - lp, t2), -1, keepdims=True)
            upd = (sp < 1.0).astype(activations.dtype)
            lower = lower * upd + (1.0 - upd) * lp
            upper = upper * (1.0 - upd) + upd * lp
        lp = (upper + lower) / 2.0
        prob = _exp_t_ref(activations - (lp + mu), t2)
    lv = (onehot * _log_t_ref(onehot + 1e-10, t1)
          - onehot * _log_t_ref(prob, t1)
          - onehot ** (2.0 - t1) / (2.0 - t1)
          + prob ** (2.0 - t1) / (2.0 - t1))
    return jnp.mean(jnp.sum(lv, -1))


# ----------------------------------- main -------------------------------------

if __name__ == "__main__":
    key = jax.random.PRNGKey(0)
    k1, k2 = jax.random.split(key)
    N, C = 32, 16
    logits = jax.random.normal(k1, (N, C), dtype=jnp.float32) * 2.0
    labels = jax.random.randint(k2, (N,), 0, C, dtype=jnp.int32)

    t1, t2, label_smooth = 0.8, 1.4, 0.06
    loss_fn = BiTemperedLogisticLoss(t1, t2, label_smooth)

    loss = loss_fn(logits, labels)
    jax.block_until_ready(loss)

    ref = _ref_loss(logits.astype(jnp.float32), labels, t1, t2, label_smooth)
    assert jnp.allclose(loss, ref, rtol=1e-3, atol=1e-3), (loss, ref)
    print("KERNEL_OK")
</pallas_src>

<mosaic_0001>
module attributes {stable_mosaic.version = 11 : i64} {
  func.func @kernel(%arg0: i32, %arg1: memref<32x16xf32, #tpu.memory_space<vmem>>, %arg2: memref<32x1xi32, #tpu.memory_space<vmem>>, %arg3: memref<32x1xf32, #tpu.memory_space<vmem>>) attributes {dimension_semantics = [#tpu.dimension_semantics<parallel>], iteration_bounds = array<i64: 1>, scalar_prefetch = 0 : i64, scratch_operands = 0 : i64, tpu.core_type = #tpu.core_type<tc>, window_params = [{transform_indices = @transform_0, window_bounds = array<i64: 32, 16>}, {transform_indices = @transform_1, window_bounds = array<i64: 32, 1>}, {transform_indices = @transform_2, window_bounds = array<i64: 32, 1>}]} {
    %c0 = arith.constant 0 : index
    %c0_0 = arith.constant 0 : index
    %0 = vector.load %arg1[%c0, %c0_0] : memref<32x16xf32, #tpu.memory_space<vmem>>, vector<32x16xf32>
    %c0_1 = arith.constant 0 : index
    %c0_2 = arith.constant 0 : index
    %1 = vector.load %arg2[%c0_1, %c0_2] : memref<32x1xi32, #tpu.memory_space<vmem>>, vector<32x1xi32>
    %2 = tpu.iota {dimensions = array<i32: 1>} : vector<32x16xi32>
    %3 = vector.broadcast %1 : vector<32x1xi32> to vector<32x16xi32>
    %4 = arith.cmpi eq, %2, %3 : vector<32x16xi32>
    %cst = arith.constant 0.939999997 : f32
    %cst_3 = arith.constant 4.000000e-03 : f32
    %5 = vector.broadcast %cst : f32 to vector<32x16xf32>
    %6 = vector.broadcast %cst_3 : f32 to vector<32x16xf32>
    %7 = arith.select %4, %5, %6 : vector<32x16xi1>, vector<32x16xf32>
    %cst_4 = arith.constant dense<0xFF800000> : vector<32xf32>
    %8 = vector.multi_reduction <maximumf>, %0, %cst_4 [1] : vector<32x16xf32> to vector<32xf32>
    %9 = vector.shape_cast %8 : vector<32xf32> to vector<32x1xf32>
    %10 = vector.broadcast %9 : vector<32x1xf32> to vector<32x16xf32>
    %11 = arith.subf %0, %10 : vector<32x16xf32>
    %cst_5 = arith.constant -4.000000e-01 : f32
    %12 = vector.broadcast %cst_5 : f32 to vector<32x16xf32>
    %13 = arith.mulf %12, %11 : vector<32x16xf32>
    %cst_6 = arith.constant 1.000000e+00 : f32
    %14 = vector.broadcast %cst_6 : f32 to vector<32x16xf32>
    %15 = arith.addf %14, %13 : vector<32x16xf32>
    %cst_7 = arith.constant 0.000000e+00 : f32
    %16 = vector.broadcast %cst_7 : f32 to vector<32x16xf32>
    %17 = arith.maximumf %15, %16 : vector<32x16xf32>
    %18 = math.log %17 : vector<32x16xf32>
    %cst_8 = arith.constant -2.500000e+00 : f32
    %19 = vector.broadcast %cst_8 : f32 to vector<32x16xf32>
    %20 = arith.mulf %19, %18 : vector<32x16xf32>
    %21 = math.exp %20 : vector<32x16xf32>
    %cst_9 = arith.constant dense<0.000000e+00> : vector<32xf32>
    %22 = vector.multi_reduction <add>, %21, %cst_9 [1] : vector<32x16xf32> to vector<32xf32>
    %23 = vector.shape_cast %22 : vector<32xf32> to vector<32x1xf32>
    %24 = math.log %23 : vector<32x1xf32>
    %cst_10 = arith.constant -4.000000e-01 : f32
    %25 = vector.broadcast %cst_10 : f32 to vector<32x1xf32>
    %26 = arith.mulf %25, %24 : vector<32x1xf32>
    %27 = math.exp %26 : vector<32x1xf32>
    %28 = vector.broadcast %27 : vector<32x1xf32> to vector<32x16xf32>
    %29 = arith.mulf %11, %28 : vector<32x16xf32>
    %cst_11 = arith.constant -4.000000e-01 : f32
    %30 = vector.broadcast %cst_11 : f32 to vector<32x16xf32>
    %31 = arith.mulf %30, %29 : vector<32x16xf32>
    %cst_12 = arith.constant 1.000000e+00 : f32
    %32 = vector.broadcast %cst_12 : f32 to vector<32x16xf32>
    %33 = arith.addf %32, %31 : vector<32x16xf32>
    %cst_13 = arith.constant 0.000000e+00 : f32
    %34 = vector.broadcast %cst_13 : f32 to vector<32x16xf32>
    %35 = arith.maximumf %33, %34 : vector<32x16xf32>
    %36 = math.log %35 : vector<32x16xf32>
    %cst_14 = arith.constant -2.500000e+00 : f32
    %37 = vector.broadcast %cst_14 : f32 to vector<32x16xf32>
    %38 = arith.mulf %37, %36 : vector<32x16xf32>
    %39 = math.exp %38 : vector<32x16xf32>
    %cst_15 = arith.constant dense<0.000000e+00> : vector<32xf32>
    %40 = vector.multi_reduction <add>, %39, %cst_15 [1] : vector<32x16xf32> to vector<32xf32>
    %41 = vector.shape_cast %40 : vector<32xf32> to vector<32x1xf32>
    %42 = math.log %41 : vector<32x1xf32>
    %cst_16 = arith.constant -4.000000e-01 : f32
    %43 = vector.broadcast %cst_16 : f32 to vector<32x1xf32>
    %44 = arith.mulf %43, %42 : vector<32x1xf32>
    %45 = math.exp %44 : vector<32x1xf32>
    %46 = vector.broadcast %45 : vector<32x1xf32> to vector<32x16xf32>
    %47 = arith.mulf %11, %46 : vector<32x16xf32>
    %cst_17 = arith.constant -4.000000e-01 : f32
    %48 = vector.broadcast %cst_17 : f32 to vector<32x16xf32>
    %49 = arith.mulf %48, %47 : vector<32x16xf32>
    %cst_18 = arith.constant 1.000000e+00 : f32
    %50 = vector.broadcast %cst_18 : f32 to vector<32x16xf32>
    %51 = arith.addf %50, %49 : vector<32x16xf32>
    %cst_19 = arith.constant 0.000000e+00 : f32
    %52 = vector.broadcast %cst_19 : f32 to vector<32x16xf32>
    %53 = arith.maximumf %51, %52 : vector<32x16xf32>
    %54 = math.log %53 : vector<32x16xf32>
    %cst_20 = arith.constant -2.500000e+00 : f32
    %55 = vector.broadcast %cst_20 : f32 to vector<32x16xf32>
    %56 = arith.mulf %55, %54 : vector<32x16xf32>
    %57 = math.exp %56 : vector<32x16xf32>
    %cst_21 = arith.constant dense<0.000000e+00> : vector<32xf32>
    %58 = vector.multi_reduction <add>, %57, %cst_21 [1] : vector<32x16xf32> to vector<32xf32>
    %59 = vector.shape_cast %58 : vector<32xf32> to vector<32x1xf32>
    %60 = math.log %59 : vector<32x1xf32>
    %cst_22 = arith.constant -4.000000e-01 : f32
    %61 = vector.broadcast %cst_22 : f32 to vector<32x1xf32>
    %62 = arith.mulf %61, %60 : vector<32x1xf32>
    %63 = math.exp %62 : vector<32x1xf32>
    %64 = vector.broadcast %63 : vector<32x1xf32> to vector<32x16xf32>
    %65 = arith.mulf %11, %64 : vector<32x16xf32>
    %cst_23 = arith.constant -4.000000e-01 : f32
    %66 = vector.broadcast %cst_23 : f32 to vector<32x16xf32>
    %67 = arith.mulf %66, %65 : vector<32x16xf32>
    %cst_24 = arith.constant 1.000000e+00 : f32
    %68 = vector.broadcast %cst_24 : f32 to vector<32x16xf32>
    %69 = arith.addf %68, %67 : vector<32x16xf32>
    %cst_25 = arith.constant 0.000000e+00 : f32
    %70 = vector.broadcast %cst_25 : f32 to vector<32x16xf32>
    %71 = arith.maximumf %69, %70 : vector<32x16xf32>
    %72 = math.log %71 : vector<32x16xf32>
    %cst_26 = arith.constant -2.500000e+00 : f32
    %73 = vector.broadcast %cst_26 : f32 to vector<32x16xf32>
    %74 = arith.mulf %73, %72 : vector<32x16xf32>
    %75 = math.exp %74 : vector<32x16xf32>
    %cst_27 = arith.constant dense<0.000000e+00> : vector<32xf32>
    %76 = vector.multi_reduction <add>, %75, %cst_27 [1] : vector<32x16xf32> to vector<32xf32>
    %77 = vector.shape_cast %76 : vector<32xf32> to vector<32x1xf32>
    %78 = math.log %77 : vector<32x1xf32>
    %cst_28 = arith.constant -4.000000e-01 : f32
    %79 = vector.broadcast %cst_28 : f32 to vector<32x1xf32>
    %80 = arith.mulf %79, %78 : vector<32x1xf32>
    %81 = math.exp %80 : vector<32x1xf32>
    %82 = vector.broadcast %81 : vector<32x1xf32> to vector<32x16xf32>
    %83 = arith.mulf %11, %82 : vector<32x16xf32>
    %cst_29 = arith.constant -4.000000e-01 : f32
    %84 = vector.broadcast %cst_29 : f32 to vector<32x16xf32>
    %85 = arith.mulf %84, %83 : vector<32x16xf32>
    %cst_30 = arith.constant 1.000000e+00 : f32
    %86 = vector.broadcast %cst_30 : f32 to vector<32x16xf32>
    %87 = arith.addf %86, %85 : vector<32x16xf32>
    %cst_31 = arith.constant 0.000000e+00 : f32
    %88 = vector.broadcast %cst_31 : f32 to vector<32x16xf32>
    %89 = arith.maximumf %87, %88 : vector<32x16xf32>
    %90 = math.log %89 : vector<32x16xf32>
    %cst_32 = arith.constant -2.500000e+00 : f32
    %91 = vector.broadcast %cst_32 : f32 to vector<32x16xf32>
    %92 = arith.mulf %91, %90 : vector<32x16xf32>
    %93 = math.exp %92 : vector<32x16xf32>
    %cst_33 = arith.constant dense<0.000000e+00> : vector<32xf32>
    %94 = vector.multi_reduction <add>, %93, %cst_33 [1] : vector<32x16xf32> to vector<32xf32>
    %95 = vector.shape_cast %94 : vector<32xf32> to vector<32x1xf32>
    %96 = math.log %95 : vector<32x1xf32>
    %cst_34 = arith.constant -4.000000e-01 : f32
    %97 = vector.broadcast %cst_34 : f32 to vector<32x1xf32>
    %98 = arith.mulf %97, %96 : vector<32x1xf32>
    %99 = math.exp %98 : vector<32x1xf32>
    %100 = vector.broadcast %99 : vector<32x1xf32> to vector<32x16xf32>
    %101 = arith.mulf %11, %100 : vector<32x16xf32>
    %cst_35 = arith.constant -4.000000e-01 : f32
    %102 = vector.broadcast %cst_35 : f32 to vector<32x16xf32>
    %103 = arith.mulf %102, %101 : vector<32x16xf32>
    %cst_36 = arith.constant 1.000000e+00 : f32
    %104 = vector.broadcast %cst_36 : f32 to vector<32x16xf32>
    %105 = arith.addf %104, %103 : vector<32x16xf32>
    %cst_37 = arith.constant 0.000000e+00 : f32
    %106 = vector.broadcast %cst_37 : f32 to vector<32x16xf32>
    %107 = arith.maximumf %105, %106 : vector<32x16xf32>
    %108 = math.log %107 : vector<32x16xf32>
    %cst_38 = arith.constant -2.500000e+00 : f32
    %109 = vector.broadcast %cst_38 : f32 to vector<32x16xf32>
    %110 = arith.mulf %109, %108 : vector<32x16xf32>
    %111 = math.exp %110 : vector<32x16xf32>
    %cst_39 = arith.constant dense<0.000000e+00> : vector<32xf32>
    %112 = vector.multi_reduction <add>, %111, %cst_39 [1] : vector<32x16xf32> to vector<32xf32>
    %113 = vector.shape_cast %112 : vector<32xf32> to vector<32x1xf32>
    %114 = math.log %113 : vector<32x1xf32>
    %cst_40 = arith.constant 4.000000e-01 : f32
    %115 = vector.broadcast %cst_40 : f32 to vector<32x1xf32>
    %116 = arith.mulf %115, %114 : vector<32x1xf32>
    %117 = math.exp %116 : vector<32x1xf32>
    %cst_41 = arith.constant 1.000000e+00 : f32
    %118 = vector.broadcast %cst_41 : f32 to vector<32x1xf32>
    %119 = arith.subf %117, %118 : vector<32x1xf32>
    %cst_42 = arith.constant 4.000000e-01 : f32
    %120 = vector.broadcast %cst_42 : f32 to vector<32x1xf32>
    %121 = arith.divf %119, %120 : vector<32x1xf32>
    %122 = arith.addf %121, %9 : vector<32x1xf32>
    %123 = vector.broadcast %122 : vector<32x1xf32> to vector<32x16xf32>
    %124 = arith.subf %0, %123 : vector<32x16xf32>
    %cst_43 = arith.constant -4.000000e-01 : f32
    %125 = vector.broadcast %cst_43 : f32 to vector<32x16xf32>
    %126 = arith.mulf %125, %124 : vector<32x16xf32>
    %cst_44 = arith.constant 1.000000e+00 : f32
    %127 = vector.broadcast %cst_44 : f32 to vector<32x16xf32>
    %128 = arith.addf %127, %126 : vector<32x16xf32>
    %cst_45 = arith.constant 0.000000e+00 : f32
    %129 = vector.broadcast %cst_45 : f32 to vector<32x16xf32>
    %130 = arith.maximumf %128, %129 : vector<32x16xf32>
    %131 = math.log %130 : vector<32x16xf32>
    %cst_46 = arith.constant -2.500000e+00 : f32
    %132 = vector.broadcast %cst_46 : f32 to vector<32x16xf32>
    %133 = arith.mulf %132, %131 : vector<32x16xf32>
    %134 = math.exp %133 : vector<32x16xf32>
    %135 = math.log %134 : vector<32x16xf32>
    %cst_47 = arith.constant 2.000000e-01 : f32
    %136 = vector.broadcast %cst_47 : f32 to vector<32x16xf32>
    %137 = arith.mulf %136, %135 : vector<32x16xf32>
    %138 = math.exp %137 : vector<32x16xf32>
    %cst_48 = arith.constant 1.000000e+00 : f32
    %139 = vector.broadcast %cst_48 : f32 to vector<32x16xf32>
    %140 = arith.subf %138, %139 : vector<32x16xf32>
    %cst_49 = arith.constant 2.000000e-01 : f32
    %141 = vector.broadcast %cst_49 : f32 to vector<32x16xf32>
    %142 = arith.divf %140, %141 : vector<32x16xf32>
    %143 = arith.mulf %138, %134 : vector<32x16xf32>
    %144 = arith.mulf %7, %142 : vector<32x16xf32>
    %cst_50 = arith.constant dense<0.000000e+00> : vector<32xf32>
    %145 = vector.multi_reduction <add>, %144, %cst_50 [1] : vector<32x16xf32> to vector<32xf32>
    %146 = vector.shape_cast %145 : vector<32xf32> to vector<32x1xf32>
    %cst_51 = arith.constant -1.0486424 : f32
    %147 = vector.broadcast %cst_51 : f32 to vector<32x1xf32>
    %148 = arith.subf %147, %146 : vector<32x1xf32>
    %cst_52 = arith.constant dense<0.000000e+00> : vector<32xf32>
    %149 = vector.multi_reduction <add>, %143, %cst_52 [1] : vector<32x16xf32> to vector<32xf32>
    %150 = vector.shape_cast %149 : vector<32xf32> to vector<32x1xf32>
    %cst_53 = arith.constant 0.833333313 : f32
    %151 = vector.broadcast %cst_53 : f32 to vector<32x1xf32>
    %152 = arith.mulf %150, %151 : vector<32x1xf32>
    %153 = arith.addf %148, %152 : vector<32x1xf32>
    %c32_i32 = arith.constant 32 : i32
    %154 = arith.muli %arg0, %c32_i32 : i32
    %155 = tpu.iota {dimensions = array<i32: 0>} : vector<32x1xi32>
    %156 = vector.broadcast %154 : i32 to vector<32x1xi32>
    %157 = arith.addi %156, %155 : vector<32x1xi32>
    %c32_i32_54 = arith.constant 32 : i32
    %158 = vector.broadcast %c32_i32_54 : i32 to vector<32x1xi32>
    %159 = arith.cmpi slt, %157, %158 : vector<32x1xi32>
    %cst_55 = arith.constant 0.000000e+00 : f32
    %160 = vector.broadcast %cst_55 : f32 to vector<32x1xf32>
    %161 = arith.select %159, %153, %160 : vector<32x1xi1>, vector<32x1xf32>
    %c0_56 = arith.constant 0 : index
    %c0_57 = arith.constant 0 : index
    %162 = vector.load %arg3[%c0_56, %c0_57] : memref<32x1xf32, #tpu.memory_space<vmem>>, vector<32x1xf32>
    tpu.vector_store %arg3[%c0_56, %c0_57], %161 {strides = array<i32>} : memref<32x1xf32, #tpu.memory_space<vmem>>, vector<32x1xf32>,
    return
  }
  func.func @transform_0(%arg0: i32) -> (i32, i32) {
    %c0_i32 = arith.constant 0 : i32
    %c0_i32_0 = arith.constant 0 : i32
    return %arg0, %c0_i32 : i32, i32
  }
  func.func @transform_1(%arg0: i32) -> (i32, i32) {
    %c0_i32 = arith.constant 0 : i32
    %c0_i32_0 = arith.constant 0 : i32
    return %arg0, %c0_i32 : i32, i32
  }
  func.func @transform_2(%arg0: i32) -> (i32, i32) {
    %c0_i32 = arith.constant 0 : i32
    %c0_i32_0 = arith.constant 0 : i32
    return %arg0, %c0_i32 : i32, i32
  }
}

</mosaic_0001>

<llo_original>
// kernel: tpu_custom_call.1
$region0: #{tpu_custom_call.1}
  #allocation0 [shape = 'u32[]', space=smem, size = 0x4, offset = 0x4, fixed_abs, tag = 'smem constant byte address 0x4 - core index']
  #allocation1 [shape = 'u32[72,128]{1,0:T(1,128)}', space=vmem, size = 0x9000, scoped, tag = 'internal scratch']
  %s0 = inlined_call_operand.vmem [shape: f32[32,16], index: 0, kind: input, shape index: {}]
  %s1 = inlined_call_operand.vmem [shape: s32[32,1], index: 1, kind: input, shape index: {}]
  %s2 = inlined_call_operand.vmem [shape: f32[32,1], index: 2, kind: output, shape index: {}]
  %s3 = sld [smem:[#allocation0]]
  $region18: #{tpu_custom_call.1} parent=0
    _
  %s5 = ssub.s32 1, %s3
  %s6 = scalar_select 0, %s5, %s3
  // Predicated region
  $region2: #{tpu_custom_call.1} parent=0 // pred_check
    _
  $region3: #{tpu_custom_call.1} parent=0 // pred_check_branch
    %8 = sbr.rel (0) target = $region5
  $region4: #{tpu_custom_call.1} parent=0 // pred_region
    _
  $region5: #{tpu_custom_call.1} parent=0 // pred_fallthru
    _
  // Predicated region
  $region6: #{tpu_custom_call.1} parent=0 // pred_check
    _
  $region7: #{tpu_custom_call.1} parent=0 // pred_check_branch
    %10 = sbr.rel (0) target = $region9
  $region8: #{tpu_custom_call.1} parent=0 // pred_region
    _
  $region9: #{tpu_custom_call.1} parent=0 // pred_fallthru
    _
  %v11 = vld [vmem:[%s0] sm:$0xff]
  %v12 = vld [vmem:[%s0 + $0x8] sm:$0xff]
  %v13 = vld [vmem:[%s0 + $0x10] sm:$0xff]
  %v14 = vld [vmem:[%s0 + $0x18] sm:$0xff]
  %v15 = vld [vmem:[%s1] sm:$0xff]
  %v16 = vld [vmem:[%s1 + $0x8] sm:$0xff]
  %v17 = vld [vmem:[%s1 + $0x10] sm:$0xff]
  %v18 = vld [vmem:[%s1 + $0x18] sm:$0xff]
  %v19 = vlaneseq
  %v20 = vand.u32 %v19, 127
  %21 = vset.pattern.permute.xlu0 0
  %22 = vperm.xlu0 %21, %v15
  %v23 = vpop.permute.xlu0 %22
  %24 = vset.pattern.permute.xlu0 0
  %25 = vperm.xlu0 %24, %v16
  %v26 = vpop.permute.xlu0 %25
  %27 = vset.pattern.permute.xlu0 0
  %28 = vperm.xlu0 %27, %v17
  %v29 = vpop.permute.xlu0 %28
  %30 = vset.pattern.permute.xlu0 0
  %31 = vperm.xlu0 %30, %v18
  %v32 = vpop.permute.xlu0 %31
  %vm33 = vcmp.eq.s32.totalorder %v20, %v23
  %vm34 = vcmp.eq.s32.totalorder %v20, %v26
  %vm35 = vcmp.eq.s32.totalorder %v20, %v29
  %vm36 = vcmp.eq.s32.totalorder %v20, %v32
  %v37 = vsel %vm33, 0.94, 0.004
  %v38 = vsel %vm34, 0.94, 0.004
  %v39 = vsel %vm35, 0.94, 0.004
  %v40 = vsel %vm36, 0.94, 0.004
  %vm41 = vcmask 130048
  %v42 = vsel %vm41, %v11, -inf
  %43 = vmax.xlane.f32.xlu0 %v42
  %v44 = vpop.xlane.xlu0 %43
  %v45 = vsel %vm41, %v12, -inf
  %46 = vmax.xlane.f32.xlu0 %v45
  %v47 = vpop.xlane.xlu0 %46
  %v48 = vsel %vm41, %v13, -inf
  %49 = vmax.xlane.f32.xlu0 %v48
  %v50 = vpop.xlane.xlu0 %49
  %v51 = vsel %vm41, %v14, -inf
  %52 = vmax.xlane.f32.xlu0 %v51
  %v53 = vpop.xlane.xlu0 %52
  %v54 = vsub.f32 %v11, %v44
  %v55 = vsub.f32 %v12, %v47
  %v56 = vsub.f32 %v13, %v50
  %v57 = vsub.f32 %v14, %v53
  %v58 = vmul.f32 %v54, -0.4
  %v59 = vmul.f32 %v55, -0.4
  %v60 = vmul.f32 %v56, -0.4
  %v61 = vmul.f32 %v57, -0.4
  %v62 = vadd.f32 %v58, 1.0
  %v63 = vadd.f32 %v59, 1.0
  %v64 = vadd.f32 %v60, 1.0
  %v65 = vadd.f32 %v61, 1.0
  %v66 = vmax.f32 %v62, 0.0
  %v67 = vmax.f32 %v63, 0.0
  %v68 = vmax.f32 %v64, 0.0
  %v69 = vmax.f32 %v65, 0.0
  %v70 = vlog2.pop %v66
  %v71 = vmul.f32 %v70, 0.6931472
  %v72 = vlog2.pop %v67
  %v73 = vmul.f32 %v72, 0.6931472
  %v74 = vlog2.pop %v68
  %v75 = vmul.f32 %v74, 0.6931472
  %v76 = vlog2.pop %v69
  %v77 = vmul.f32 %v76, 0.6931472
  %v78 = vmul.f32 %v71, -2.5
  %v79 = vmul.f32 %v73, -2.5
  %v80 = vmul.f32 %v75, -2.5
  %v81 = vmul.f32 %v77, -2.5
  %v82 = vmul.f32 %v78, 1.442695
  %v83 = vpow.pop %v82
  %v84 = vmul.f32 %v79, 1.442695
  %v85 = vpow.pop %v84
  %v86 = vmul.f32 %v80, 1.442695
  %v87 = vpow.pop %v86
  %v88 = vmul.f32 %v81, 1.442695
  %v89 = vpow.pop %v88
  %v90 = vsel %vm41, %v83, 0.0
  %91 = vadd.xlane.f32.xlu0 %v90
  %v92 = vpop.xlane.xlu0 %91
  %v93 = vsel %vm41, %v85, 0.0
  %94 = vadd.xlane.f32.xlu0 %v93
  %v95 = vpop.xlane.xlu0 %94
  %v96 = vsel %vm41, %v87, 0.0
  %97 = vadd.xlane.f32.xlu0 %v96
  %v98 = vpop.xlane.xlu0 %97
  %v99 = vsel %vm41, %v89, 0.0
  %100 = vadd.xlane.f32.xlu0 %v99
  %v101 = vpop.xlane.xlu0 %100
  %v102 = vlog2.pop %v92
  %v103 = vmul.f32 %v102, 0.6931472
  %v104 = vlog2.pop %v95
  %v105 = vmul.f32 %v104, 0.6931472
  %v106 = vlog2.pop %v98
  %v107 = vmul.f32 %v106, 0.6931472
  %v108 = vlog2.pop %v101
  %v109 = vmul.f32 %v108, 0.6931472
  %v110 = vmul.f32 %v103, -0.4
  %v111 = vmul.f32 %v105, -0.4
  %v112 = vmul.f32 %v107, -0.4
  %v113 = vmul.f32 %v109, -0.4
  %v114 = vmul.f32 %v110, 1.442695
  %v115 = vpow.pop %v114
  %v116 = vmul.f32 %v111, 1.442695
  %v117 = vpow.pop %v116
  %v118 = vmul.f32 %v112, 1.442695
  %v119 = vpow.pop %v118
  %v120 = vmul.f32 %v113, 1.442695
  %v121 = vpow.pop %v120
  %v122 = vmul.f32 %v54, %v115
  %v123 = vmul.f32 %v55, %v117
  %v124 = vmul.f32 %v56, %v119
  %v125 = vmul.f32 %v57, %v121
  %v126 = vmul.f32 %v122, -0.4
  %v127 = vmul.f32 %v123, -0.4
  %v128 = vmul.f32 %v124, -0.4
  %v129 = vmul.f32 %v125, -0.4
  %v130 = vadd.f32 %v126, 1.0
  %v131 = vadd.f32 %v127, 1.0
  %v132 = vadd.f32 %v128, 1.0
  %v133 = vadd.f32 %v129, 1.0
  %v134 = vmax.f32 %v130, 0.0
  %v135 = vmax.f32 %v131, 0.0
  %v136 = vmax.f32 %v132, 0.0
  %v137 = vmax.f32 %v133, 0.0
  %v138 = vlog2.pop %v134
  %v139 = vmul.f32 %v138, 0.6931472
  %v140 = vlog2.pop %v135
  %v141 = vmul.f32 %v140, 0.6931472
  %v142 = vlog2.pop %v136
  %v143 = vmul.f32 %v142, 0.6931472
  %v144 = vlog2.pop %v137
  %v145 = vmul.f32 %v144, 0.6931472
  %v146 = vmul.f32 %v139, -2.5
  %v147 = vmul.f32 %v141, -2.5
  %v148 = vmul.f32 %v143, -2.5
  %v149 = vmul.f32 %v145, -2.5
  %v150 = vmul.f32 %v146, 1.442695
  %v151 = vpow.pop %v150
  %v152 = vmul.f32 %v147, 1.442695
  %v153 = vpow.pop %v152
  %v154 = vmul.f32 %v148, 1.442695
  %v155 = vpow.pop %v154
  %v156 = vmul.f32 %v149, 1.442695
  %v157 = vpow.pop %v156
  %v158 = vsel %vm41, %v151, 0.0
  %159 = vadd.xlane.f32.xlu0 %v158
  %v160 = vpop.xlane.xlu0 %159
  %v161 = vsel %vm41, %v153, 0.0
  %162 = vadd.xlane.f32.xlu0 %v161
  %v163 = vpop.xlane.xlu0 %162
  %v164 = vsel %vm41, %v155, 0.0
  %165 = vadd.xlane.f32.xlu0 %v164
  %v166 = vpop.xlane.xlu0 %165
  %v167 = vsel %vm41, %v157, 0.0
  %168 = vadd.xlane.f32.xlu0 %v167
  %v169 = vpop.xlane.xlu0 %168
  %v170 = vlog2.pop %v160
  %v171 = vmul.f32 %v170, 0.6931472
  %v172 = vlog2.pop %v163
  %v173 = vmul.f32 %v172, 0.6931472
  %v174 = vlog2.pop %v166
  %v175 = vmul.f32 %v174, 0.6931472
  %v176 = vlog2.pop %v169
  %v177 = vmul.f32 %v176, 0.6931472
  %v178 = vmul.f32 %v171, -0.4
  %v179 = vmul.f32 %v173, -0.4
  %v180 = vmul.f32 %v175, -0.4
  %v181 = vmul.f32 %v177, -0.4
  %v182 = vmul.f32 %v178, 1.442695
  %v183 = vpow.pop %v182
  %v184 = vmul.f32 %v179, 1.442695
  %v185 = vpow.pop %v184
  %v186 = vmul.f32 %v180, 1.442695
  %v187 = vpow.pop %v186
  %v188 = vmul.f32 %v181, 1.442695
  %v189 = vpow.pop %v188
  %v190 = vmul.f32 %v54, %v183
  %v191 = vmul.f32 %v55, %v185
  %v192 = vmul.f32 %v56, %v187
  %v193 = vmul.f32 %v57, %v189
  %v194 = vmul.f32 %v190, -0.4
  %v195 = vmul.f32 %v191, -0.4
  %v196 = vmul.f32 %v192, -0.4
  %v197 = vmul.f32 %v193, -0.4
  %v198 = vadd.f32 %v194, 1.0
  %v199 = vadd.f32 %v195, 1.0
  %v200 = vadd.f32 %v196, 1.0
  %v201 = vadd.f32 %v197, 1.0
  %v202 = vmax.f32 %v198, 0.0
  %v203 = vmax.f32 %v199, 0.0
  %v204 = vmax.f32 %v200, 0.0
  %v205 = vmax.f32 %v201, 0.0
  %v206 = vlog2.pop %v202
  %v207 = vmul.f32 %v206, 0.6931472
  %v208 = vlog2.pop %v203
  %v209 = vmul.f32 %v208, 0.6931472
  %v210 = vlog2.pop %v204
  %v211 = vmul.f32 %v210, 0.6931472
  %v212 = vlog2.pop %v205
  %v213 = vmul.f32 %v212, 0.6931472
  %v214 = vmul.f32 %v207, -2.5
  %v215 = vmul.f32 %v209, -2.5
  %v216 = vmul.f32 %v211, -2.5
  %v217 = vmul.f32 %v213, -2.5
  %v218 = vmul.f32 %v214, 1.442695
  %v219 = vpow.pop %v218
  %v220 = vmul.f32 %v215, 1.442695
  %v221 = vpow.pop %v220
  %v222 = vmul.f32 %v216, 1.442695
  %v223 = vpow.pop %v222
  %v224 = vmul.f32 %v217, 1.442695
  %v225 = vpow.pop %v224
  %v226 = vsel %vm41, %v219, 0.0
  %227 = vadd.xlane.f32.xlu0 %v226
  %v228 = vpop.xlane.xlu0 %227
  %v229 = vsel %vm41, %v221, 0.0
  %230 = vadd.xlane.f32.xlu0 %v229
  %v231 = vpop.xlane.xlu0 %230
  %v232 = vsel %vm41, %v223, 0.0
  %233 = vadd.xlane.f32.xlu0 %v232
  %v234 = vpop.xlane.xlu0 %233
  %v235 = vsel %vm41, %v225, 0.0
  %236 = vadd.xlane.f32.xlu0 %v235
  %v237 = vpop.xlane.xlu0 %236
  %v238 = vlog2.pop %v228
  %v239 = vmul.f32 %v238, 0.6931472
  %v240 = vlog2.pop %v231
  %v241 = vmul.f32 %v240, 0.6931472
  %v242 = vlog2.pop %v234
  %v243 = vmul.f32 %v242, 0.6931472
  %v244 = vlog2.pop %v237
  %v245 = vmul.f32 %v244, 0.6931472
  %v246 = vmul.f32 %v239, -0.4
  %v247 = vmul.f32 %v241, -0.4
  %v248 = vmul.f32 %v243, -0.4
  %v249 = vmul.f32 %v245, -0.4
  %v250 = vmul.f32 %v246, 1.442695
  %v251 = vpow.pop %v250
  %v252 = vmul.f32 %v247, 1.442695
  %v253 = vpow.pop %v252
  %v254 = vmul.f32 %v248, 1.442695
  %v255 = vpow.pop %v254
  %v256 = vmul.f32 %v249, 1.442695
  %v257 = vpow.pop %v256
  %v258 = vmul.f32 %v54, %v251
  %v259 = vmul.f32 %v55, %v253
  %v260 = vmul.f32 %v56, %v255
  %v261 = vmul.f32 %v57, %v257
  %v262 = vmul.f32 %v258, -0.4
  %v263 = vmul.f32 %v259, -0.4
  %v264 = vmul.f32 %v260, -0.4
  %v265 = vmul.f32 %v261, -0.4
  %v266 = vadd.f32 %v262, 1.0
  %v267 = vadd.f32 %v263, 1.0
  %v268 = vadd.f32 %v264, 1.0
  %v269 = vadd.f32 %v265, 1.0
  %v270 = vmax.f32 %v266, 0.0
  %v271 = vmax.f32 %v267, 0.0
  %v272 = vmax.f32 %v268, 0.0
  %v273 = vmax.f32 %v269, 0.0
  %v274 = vlog2.pop %v270
  %v275 = vmul.f32 %v274, 0.6931472
  %v276 = vlog2.pop %v271
  %v277 = vmul.f32 %v276, 0.6931472
  %v278 = vlog2.pop %v272
  %v279 = vmul.f32 %v278, 0.6931472
  %v280 = vlog2.pop %v273
  %v281 = vmul.f32 %v280, 0.6931472
  %v282 = vmul.f32 %v275, -2.5
  %v283 = vmul.f32 %v277, -2.5
  %v284 = vmul.f32 %v279, -2.5
  %v285 = vmul.f32 %v281, -2.5
  %v286 = vmul.f32 %v282, 1.442695
  %v287 = vpow.pop %v286
  %v288 = vmul.f32 %v283, 1.442695
  %v289 = vpow.pop %v288
  %v290 = vmul.f32 %v284, 1.442695
  %v291 = vpow.pop %v290
  %v292 = vmul.f32 %v285, 1.442695
  %v293 = vpow.pop %v292
  %v294 = vsel %vm41, %v287, 0.0
  %295 = vadd.xlane.f32.xlu0 %v294
  %v296 = vpop.xlane.xlu0 %295
  %v297 = vsel %vm41, %v289, 0.0
  %298 = vadd.xlane.f32.xlu0 %v297
  %v299 = vpop.xlane.xlu0 %298
  %v300 = vsel %vm41, %v291, 0.0
  %301 = vadd.xlane.f32.xlu0 %v300
  %v302 = vpop.xlane.xlu0 %301
  %v303 = vsel %vm41, %v293, 0.0
  %304 = vadd.xlane.f32.xlu0 %v303
  %v305 = vpop.xlane.xlu0 %304
  %v306 = vlog2.pop %v296
  %v307 = vmul.f32 %v306, 0.6931472
  %v308 = vlog2.pop %v299
  %v309 = vmul.f32 %v308, 0.6931472
  %v310 = vlog2.pop %v302
  %v311 = vmul.f32 %v310, 0.6931472
  %v312 = vlog2.pop %v305
  %v313 = vmul.f32 %v312, 0.6931472
  %v314 = vmul.f32 %v307, -0.4
  %v315 = vmul.f32 %v309, -0.4
  %v316 = vmul.f32 %v311, -0.4
  %v317 = vmul.f32 %v313, -0.4
  %v318 = vmul.f32 %v314, 1.442695
  %v319 = vpow.pop %v318
  %v320 = vmul.f32 %v315, 1.442695
  %v321 = vpow.pop %v320
  %v322 = vmul.f32 %v316, 1.442695
  %v323 = vpow.pop %v322
  %v324 = vmul.f32 %v317, 1.442695
  %v325 = vpow.pop %v324
  %v326 = vmul.f32 %v54, %v319
  %v327 = vmul.f32 %v55, %v321
  %v328 = vmul.f32 %v56, %v323
  %v329 = vmul.f32 %v57, %v325
  %v330 = vmul.f32 %v326, -0.4
  %v331 = vmul.f32 %v327, -0.4
  %v332 = vmul.f32 %v328, -0.4
  %v333 = vmul.f32 %v329, -0.4
  %v334 = vadd.f32 %v330, 1.0
  %v335 = vadd.f32 %v331, 1.0
  %v336 = vadd.f32 %v332, 1.0
  %v337 = vadd.f32 %v333, 1.0
  %v338 = vmax.f32 %v334, 0.0
  %v339 = vmax.f32 %v335, 0.0
  %v340 = vmax.f32 %v336, 0.0
  %v341 = vmax.f32 %v337, 0.0
  %v342 = vlog2.pop %v338
  %v343 = vmul.f32 %v342, 0.6931472
  %v344 = vlog2.pop %v339
  %v345 = vmul.f32 %v344, 0.6931472
  %v346 = vlog2.pop %v340
  %v347 = vmul.f32 %v346, 0.6931472
  %v348 = vlog2.pop %v341
  %v349 = vmul.f32 %v348, 0.6931472
  %v350 = vmul.f32 %v343, -2.5
  %v351 = vmul.f32 %v345, -2.5
  %v352 = vmul.f32 %v347, -2.5
  %v353 = vmul.f32 %v349, -2.5
  %v354 = vmul.f32 %v350, 1.442695
  %v355 = vpow.pop %v354
  %v356 = vmul.f32 %v351, 1.442695
  %v357 = vpow.pop %v356
  %v358 = vmul.f32 %v352, 1.442695
  %v359 = vpow.pop %v358
  %v360 = vmul.f32 %v353, 1.442695
  %v361 = vpow.pop %v360
  %v362 = vsel %vm41, %v355, 0.0
  %363 = vadd.xlane.f32.xlu0 %v362
  %v364 = vpop.xlane.xlu0 %363
  %v365 = vsel %vm41, %v357, 0.0
  %366 = vadd.xlane.f32.xlu0 %v365
  %v367 = vpop.xlane.xlu0 %366
  %v368 = vsel %vm41, %v359, 0.0
  %369 = vadd.xlane.f32.xlu0 %v368
  %v370 = vpop.xlane.xlu0 %369
  %v371 = vsel %vm41, %v361, 0.0
  %372 = vadd.xlane.f32.xlu0 %v371
  %v373 = vpop.xlane.xlu0 %372
  %v374 = vlog2.pop %v364
  %v375 = vmul.f32 %v374, 0.6931472
  %v376 = vlog2.pop %v367
  %v377 = vmul.f32 %v376, 0.6931472
  %v378 = vlog2.pop %v370
  %v379 = vmul.f32 %v378, 0.6931472
  %v380 = vlog2.pop %v373
  %v381 = vmul.f32 %v380, 0.6931472
  %v382 = vmul.f32 %v375, -0.4
  %v383 = vmul.f32 %v377, -0.4
  %v384 = vmul.f32 %v379, -0.4
  %v385 = vmul.f32 %v381, -0.4
  %v386 = vmul.f32 %v382, 1.442695
  %v387 = vpow.pop %v386
  %v388 = vmul.f32 %v383, 1.442695
  %v389 = vpow.pop %v388
  %v390 = vmul.f32 %v384, 1.442695
  %v391 = vpow.pop %v390
  %v392 = vmul.f32 %v385, 1.442695
  %v393 = vpow.pop %v392
  %v394 = vmul.f32 %v54, %v387
  %v395 = vmul.f32 %v55, %v389
  %v396 = vmul.f32 %v56, %v391
  %v397 = vmul.f32 %v57, %v393
  %v398 = vmul.f32 %v394, -0.4
  %v399 = vmul.f32 %v395, -0.4
  %v400 = vmul.f32 %v396, -0.4
  %v401 = vmul.f32 %v397, -0.4
  %v402 = vadd.f32 %v398, 1.0
  %v403 = vadd.f32 %v399, 1.0
  %v404 = vadd.f32 %v400, 1.0
  %v405 = vadd.f32 %v401, 1.0
  %v406 = vmax.f32 %v402, 0.0
  %v407 = vmax.f32 %v403, 0.0
  %v408 = vmax.f32 %v404, 0.0
  %v409 = vmax.f32 %v405, 0.0
  %v410 = vlog2.pop %v406
  %v411 = vmul.f32 %v410, 0.6931472
  %v412 = vlog2.pop %v407
  %v413 = vmul.f32 %v412, 0.6931472
  %v414 = vlog2.pop %v408
  %v415 = vmul.f32 %v414, 0.6931472
  %v416 = vlog2.pop %v409
  %v417 = vmul.f32 %v416, 0.6931472
  %v418 = vmul.f32 %v411, -2.5
  %v419 = vmul.f32 %v413, -2.5
  %v420 = vmul.f32 %v415, -2.5
  %v421 = vmul.f32 %v417, -2.5
  %v422 = vmul.f32 %v418, 1.442695
  %v423 = vpow.pop %v422
  %v424 = vmul.f32 %v419, 1.442695
  %v425 = vpow.pop %v424
  %v426 = vmul.f32 %v420, 1.442695
  %v427 = vpow.pop %v426
  %v428 = vmul.f32 %v421, 1.442695
  %v429 = vpow.pop %v428
  %v430 = vsel %vm41, %v423, 0.0
  %431 = vadd.xlane.f32.xlu0 %v430
  %v432 = vpop.xlane.xlu0 %431
  %v433 = vsel %vm41, %v425, 0.0
  %434 = vadd.xlane.f32.xlu0 %v433
  %v435 = vpop.xlane.xlu0 %434
  %v436 = vsel %vm41, %v427, 0.0
  %437 = vadd.xlane.f32.xlu0 %v436
  %v438 = vpop.xlane.xlu0 %437
  %v439 = vsel %vm41, %v429, 0.0
  %440 = vadd.xlane.f32.xlu0 %v439
  %v441 = vpop.xlane.xlu0 %440
  %v442 = vlog2.pop %v432
  %v443 = vmul.f32 %v442, 0.6931472
  %v444 = vlog2.pop %v435
  %v445 = vmul.f32 %v444, 0.6931472
  %v446 = vlog2.pop %v438
  %v447 = vmul.f32 %v446, 0.6931472
  %v448 = vlog2.pop %v441
  %v449 = vmul.f32 %v448, 0.6931472
  %v450 = vmul.f32 %v443, 0.4
  %v451 = vmul.f32 %v445, 0.4
  %v452 = vmul.f32 %v447, 0.4
  %v453 = vmul.f32 %v449, 0.4
  %v454 = vmul.f32 %v450, 1.442695
  %v455 = vpow.pop %v454
  %v456 = vmul.f32 %v451, 1.442695
  %v457 = vpow.pop %v456
  %v458 = vmul.f32 %v452, 1.442695
  %v459 = vpow.pop %v458
  %v460 = vmul.f32 %v453, 1.442695
  %v461 = vpow.pop %v460
  %v462 = vsub.f32 %v455, 1.0
  %v463 = vsub.f32 %v457, 1.0
  %v464 = vsub.f32 %v459, 1.0
  %v465 = vsub.f32 %v461, 1.0
  %v466 = vrcp.pop 0.4
  %v467 = vmul.f32 0.4, %v466
  %v468 = vsub.f32 1.0, %v467
  %v469 = vmul.f32 %v466, %v468
  %v470 = vadd.f32 %v466, %v469
  %vm471 = vweird.f32 %v466
  %v472 = vsel %vm471, %v466, %v470
  %v473 = vmul.f32 %v462, %v472
  %v474 = vmul.f32 %v463, %v472
  %v475 = vmul.f32 %v464, %v472
  %v476 = vmul.f32 %v465, %v472
  %v477 = vadd.f32 %v473, %v44
  %v478 = vadd.f32 %v474, %v47
  %v479 = vadd.f32 %v475, %v50
  %v480 = vadd.f32 %v476, %v53
  %v481 = vsub.f32 %v11, %v477
  %v482 = vsub.f32 %v12, %v478
  %v483 = vsub.f32 %v13, %v479
  %v484 = vsub.f32 %v14, %v480
  %v485 = vmul.f32 %v481, -0.4
  %v486 = vmul.f32 %v482, -0.4
  %v487 = vmul.f32 %v483, -0.4
  %v488 = vmul.f32 %v484, -0.4
  %v489 = vadd.f32 %v485, 1.0
  %v490 = vadd.f32 %v486, 1.0
  %v491 = vadd.f32 %v487, 1.0
  %v492 = vadd.f32 %v488, 1.0
  %v493 = vmax.f32 %v489, 0.0
  %v494 = vmax.f32 %v490, 0.0
  %v495 = vmax.f32 %v491, 0.0
  %v496 = vmax.f32 %v492, 0.0
  %v497 = vlog2.pop %v493
  %v498 = vmul.f32 %v497, 0.6931472
  %v499 = vlog2.pop %v494
  %v500 = vmul.f32 %v499, 0.6931472
  %v501 = vlog2.pop %v495
  %v502 = vmul.f32 %v501, 0.6931472
  %v503 = vlog2.pop %v496
  %v504 = vmul.f32 %v503, 0.6931472
  %v505 = vmul.f32 %v498, -2.5
  %v506 = vmul.f32 %v500, -2.5
  %v507 = vmul.f32 %v502, -2.5
  %v508 = vmul.f32 %v504, -2.5
  %v509 = vmul.f32 %v505, 1.442695
  %v510 = vpow.pop %v509
  %v511 = vmul.f32 %v506, 1.442695
  %v512 = vpow.pop %v511
  %v513 = vmul.f32 %v507, 1.442695
  %v514 = vpow.pop %v513
  %v515 = vmul.f32 %v508, 1.442695
  %v516 = vpow.pop %v515
  %v517 = vlog2.pop %v510
  %v518 = vmul.f32 %v517, 0.6931472
  %v519 = vlog2.pop %v512
  %v520 = vmul.f32 %v519, 0.6931472
  %v521 = vlog2.pop %v514
  %v522 = vmul.f32 %v521, 0.6931472
  %v523 = vlog2.pop %v516
  %v524 = vmul.f32 %v523, 0.6931472
  %v525 = vmul.f32 %v518, 0.2
  %v526 = vmul.f32 %v520, 0.2
  %v527 = vmul.f32 %v522, 0.2
  %v528 = vmul.f32 %v524, 0.2
  %v529 = vmul.f32 %v525, 1.442695
  %v530 = vpow.pop %v529
  %v531 = vmul.f32 %v526, 1.442695
  %v532 = vpow.pop %v531
  %v533 = vmul.f32 %v527, 1.442695
  %v534 = vpow.pop %v533
  %v535 = vmul.f32 %v528, 1.442695
  %v536 = vpow.pop %v535
  %v537 = vsub.f32 %v530, 1.0
  %v538 = vsub.f32 %v532, 1.0
  %v539 = vsub.f32 %v534, 1.0
  %v540 = vsub.f32 %v536, 1.0
  %v541 = vrcp.pop 0.2
  %v542 = vmul.f32 0.2, %v541
  %v543 = vsub.f32 1.0, %v542
  %v544 = vmul.f32 %v541, %v543
  %v545 = vadd.f32 %v541, %v544
  %vm546 = vweird.f32 %v541
  %v547 = vsel %vm546, %v541, %v545
  %v548 = vmul.f32 %v537, %v547
  %v549 = vmul.f32 %v538, %v547
  %v550 = vmul.f32 %v539, %v547
  %v551 = vmul.f32 %v540, %v547
  %v552 = vmul.f32 %v530, %v510
  %v553 = vmul.f32 %v532, %v512
  %v554 = vmul.f32 %v534, %v514
  %v555 = vmul.f32 %v536, %v516
  %v556 = vmul.f32 %v37, %v548
  %v557 = vmul.f32 %v38, %v549
  %v558 = vmul.f32 %v39, %v550
  %v559 = vmul.f32 %v40, %v551
  %v560 = vsel %vm41, %v556, 0.0
  %561 = vadd.xlane.f32.xlu0 %v560
  %v562 = vpop.xlane.xlu0 %561
  %v563 = vsel %vm41, %v557, 0.0
  %564 = vadd.xlane.f32.xlu0 %v563
  %v565 = vpop.xlane.xlu0 %564
  %v566 = vsel %vm41, %v558, 0.0
  %567 = vadd.xlane.f32.xlu0 %v566
  %v568 = vpop.xlane.xlu0 %567
  %v569 = vsel %vm41, %v559, 0.0
  %570 = vadd.xlane.f32.xlu0 %v569
  %v571 = vpop.xlane.xlu0 %570
  %v572 = vsub.f32 -1.0486424, %v562
  %v573 = vsub.f32 -1.0486424, %v565
  %v574 = vsub.f32 -1.0486424, %v568
  %v575 = vsub.f32 -1.0486424, %v571
  %v576 = vsel %vm41, %v552, 0.0
  %577 = vadd.xlane.f32.xlu0 %v576
  %v578 = vpop.xlane.xlu0 %577
  %v579 = vsel %vm41, %v553, 0.0
  %580 = vadd.xlane.f32.xlu0 %v579
  %v581 = vpop.xlane.xlu0 %580
  %v582 = vsel %vm41, %v554, 0.0
  %583 = vadd.xlane.f32.xlu0 %v582
  %v584 = vpop.xlane.xlu0 %583
  %v585 = vsel %vm41, %v555, 0.0
  %586 = vadd.xlane.f32.xlu0 %v585
  %v587 = vpop.xlane.xlu0 %586
  %v588 = vmul.f32 %v578, 0.8333333
  %v589 = vmul.f32 %v581, 0.8333333
  %v590 = vmul.f32 %v584, 0.8333333
  %v591 = vmul.f32 %v587, 0.8333333
  %v592 = vadd.f32 %v572, %v588
  %v593 = vadd.f32 %v573, %v589
  %v594 = vadd.f32 %v574, %v590
  %v595 = vadd.f32 %v575, %v591
  %s596 = smul.u32 0, 32
  %v597 = vlaneseq
  %v598 = vshrl.u32 %v597, 7
  %v599 = vadd.s32 %v598, 8
  %v600 = vadd.s32 %v598, 16
  %v601 = vadd.s32 %v598, 24
  %v602 = vstv %s596
  %v603 = vadd.s32 %v602, %v598
  %v604 = vadd.s32 %v602, %v599
  %v605 = vadd.s32 %v602, %v600
  %v606 = vadd.s32 %v602, %v601
  %vm607 = vcmp.lt.s32.totalorder %v603, 32
  %vm608 = vcmp.lt.s32.totalorder %v604, 32
  %vm609 = vcmp.lt.s32.totalorder %v605, 32
  %vm610 = vcmp.lt.s32.totalorder %v606, 32
  %v611 = vsel %vm607, %v592, 0.0
  %v612 = vsel %vm608, %v593, 0.0
  %v613 = vsel %vm609, %v594, 0.0
  %v614 = vsel %vm610, %v595, 0.0
  %vm615 = vcmask 7168
  %616 = vst.msk [vmem:[%s2] sm:$0xff] %vm615, %v611
  %617 = vst.msk [vmem:[%s2 + $0x8] sm:$0xff] %vm615, %v612
  %618 = vst.msk [vmem:[%s2 + $0x10] sm:$0xff] %vm615, %v613
  %619 = vst.msk [vmem:[%s2 + $0x18] sm:$0xff] %vm615, %v614
  // Predicated region
  $region10: #{tpu_custom_call.1} parent=0 // pred_check
    _
  $region11: #{tpu_custom_call.1} parent=0 // pred_check_branch
    %621 = sbr.rel (0) target = $region13
  $region12: #{tpu_custom_call.1} parent=0 // pred_region
    _
  $region13: #{tpu_custom_call.1} parent=0 // pred_fallthru
    _
  // Predicated region
  $region14: #{tpu_custom_call.1} parent=0 // pred_check
    _
  $region15: #{tpu_custom_call.1} parent=0 // pred_check_branch
    %623 = sbr.rel (0) target = $region17
  $region16: #{tpu_custom_call.1} parent=0 // pred_region
    _
  $region17: #{tpu_custom_call.1} parent=0 // pred_fallthru
    _

</llo_original>
